<compile_context>
chip_gen: v7x
topology: tpu7x:2x2x1
jax: 0.10.0
libtpu: 0.0.40
codegen_flags: <defaults>
</compile_context>

<pallas_src>
import jax
import jax.numpy as jnp
from jax.experimental import pallas as pl
from jax.experimental.pallas import tpu as pltpu


def se_kernel(x_ref, w1t_ref, b1_ref, w2t_ref, b2_ref, o_ref):
    """TB batch elements per grid step, row-form excitation.

    x_ref/o_ref: (TB, C, HW)   w1t_ref: (C, Cr)   b1_ref: (1, Cr)
    w2t_ref: (Cr, C)           b2_ref: (1, C)
    """
    x = x_ref[...]                                          # (TB, C, HW) f32

    # --- squeeze: global average pool over the spatial (lane) axis ---
    # Static 1/HW multiply instead of a per-element divide.
    pooled = jnp.sum(x, axis=-1) * (1.0 / x.shape[-1])      # (TB, C), lane-dense

    # --- excitation: Linear -> ReLU -> Linear -> Sigmoid (row form, MXU) ---
    h = jnp.dot(pooled, w1t_ref[...], preferred_element_type=jnp.float32)
    h = jnp.maximum(h + b1_ref[...], 0.0)                   # (TB, Cr)
    y = jnp.dot(h, w2t_ref[...], preferred_element_type=jnp.float32)
    y = jax.nn.sigmoid(y + b2_ref[...])                     # (TB, C)

    # --- scale: broadcast the per-(batch, channel) gate over the spatial axis ---
    o_ref[...] = x * y[:, :, None]


def _pick_block_batch(B, slab_bytes, weight_bytes):
    """Choose TB (batches per grid step) and report the chip VMEM capacity."""
    try:
        vmem_cap = int(pltpu.get_tpu_info().vmem_capacity_bytes)
    except Exception:  # pragma: no cover - conservative fallback (v7x physical)
        vmem_cap = 64 * 1024 * 1024

    headroom = 4 << 20
    # 2x double-buffered input blocks + 2x double-buffered output blocks.
    budget = (vmem_cap * 3) // 4 - 2 * weight_bytes - headroom
    tb_vmem = max(1, budget // (4 * slab_bytes))
    tb_target = max(1, (4 << 20) // slab_bytes)     # aim for ~4 MiB x blocks
    tb = int(min(B, tb_vmem, tb_target))

    # Keep >= ~8 grid steps when the batch is big enough to allow it (feeds
    # both v7x TensorCores with pipelined steps); never split a batch that
    # already fits entirely in one block.
    if tb < B and pl.cdiv(B, tb) < 8:
        tb = max(1, B // 8)

    # Largest divisor of B <= tb: avoids padded (out-of-bounds) blocks.
    while B % tb:
        tb -= 1
    return tb, vmem_cap


def se_layer(x, w1, b1, w2, b2):
    """x: (B, C, H, W) f32.  w1: (C//r, C), b1: (C//r,), w2: (C, C//r), b2: (C,)
    in PyTorch-native (out_features, in_features) layout."""
    B, C, H, W = x.shape
    HW = H * W
    Cr = w1.shape[0]

    # Layout plumbing only (free views in XLA): flatten spatial, pre-transpose
    # weights for the row-form excitation, biases as broadcastable rows.
    x_flat = x.reshape(B, C, HW)
    w1t = w1.T                      # (C, Cr)
    w2t = w2.T                      # (Cr, C)
    b1r = b1.reshape(1, Cr)
    b2r = b2.reshape(1, C)

    itemsize = jnp.dtype(x.dtype).itemsize
    slab_bytes = C * HW * itemsize
    weight_bytes = sum(int(a.size) * jnp.dtype(a.dtype).itemsize
                       for a in (w1t, b1r, w2t, b2r))

    TB, vmem_cap = _pick_block_batch(B, slab_bytes, weight_bytes)
    num_blocks = B // TB

    vmem_limit = int(min(
        vmem_cap,
        max(16 << 20, 4 * TB * slab_bytes + 2 * weight_bytes + (4 << 20)),
    ))

    cost = pl.CostEstimate(
        flops=int(3 * B * C * HW + 4 * B * C * Cr + 2 * B * (C + Cr)),
        transcendentals=int(B * C),                      # sigmoid
        bytes_accessed=int(2 * x.size * itemsize + weight_bytes),
    )

    grid_spec = pltpu.PrefetchScalarGridSpec(
        num_scalar_prefetch=0,
        grid=(num_blocks,),
        in_specs=[
            pl.BlockSpec((TB, C, HW), lambda b: (b, 0, 0)),   # x streamed
            pl.BlockSpec((C, Cr), lambda b: (0, 0)),          # resident weights
            pl.BlockSpec((1, Cr), lambda b: (0, 0)),
            pl.BlockSpec((Cr, C), lambda b: (0, 0)),
            pl.BlockSpec((1, C), lambda b: (0, 0)),
        ],
        out_specs=pl.BlockSpec((TB, C, HW), lambda b: (b, 0, 0)),
    )

    out_flat = pl.pallas_call(
        se_kernel,
        out_shape=jax.ShapeDtypeStruct((B, C, HW), x.dtype),
        grid_spec=grid_spec,
        compiler_params=pltpu.CompilerParams(
            dimension_semantics=("parallel",),   # shard batch blocks across TCs
            vmem_limit_bytes=vmem_limit,
        ),
        cost_estimate=cost,
    )(x_flat, w1t, b1r, w2t, b2r)

    return out_flat.reshape(B, C, H, W)


def make_params(key, channel, reduction=8):
    """Deterministic Linear params, PyTorch-style uniform(-1/sqrt(fan_in), ...),
    stored in PyTorch-native (out_features, in_features) layout."""
    hidden = channel // reduction
    k1, k2, k3, k4 = jax.random.split(key, 4)
    s1 = 1.0 / jnp.sqrt(channel)   # fan_in of Linear(channel, hidden)
    s2 = 1.0 / jnp.sqrt(hidden)    # fan_in of Linear(hidden, channel)
    w1 = jax.random.uniform(k1, (hidden, channel), jnp.float32, -s1, s1)
    b1 = jax.random.uniform(k2, (hidden,), jnp.float32, -s1, s1)
    w2 = jax.random.uniform(k3, (channel, hidden), jnp.float32, -s2, s2)
    b2 = jax.random.uniform(k4, (channel,), jnp.float32, -s2, s2)
    return w1, b1, w2, b2


def se_layer_ref(x, w1, b1, w2, b2):
    """Pure-JAX reference (PyTorch semantics) for sanity checking."""
    pooled = jnp.mean(x, axis=(2, 3))                 # (B, C)
    h = jnp.maximum(pooled @ w1.T + b1, 0.0)          # (B, C//r)
    y = jax.nn.sigmoid(h @ w2.T + b2)                 # (B, C)
    return x * y[:, :, None, None]


if __name__ == "__main__":
    key = jax.random.PRNGKey(0)
    kx, kp = jax.random.split(key)

    # channel=32, reduction=8 -> hidden=4; H=W=16 so HW=256 (lane-dense stores).
    B, C, H, W = 2, 32, 16, 16
    x = jax.random.normal(kx, (B, C, H, W), jnp.float32)
    w1, b1, w2, b2 = make_params(kp, C, reduction=8)

    out = jax.block_until_ready(se_layer(x, w1, b1, w2, b2))

    ref = se_layer_ref(x, w1, b1, w2, b2)
    assert out.shape == x.shape
    assert jnp.allclose(out, ref, atol=1e-5, rtol=1e-5)

    print("KERNEL_OK")
</pallas_src>

<mosaic_0001>
module attributes {stable_mosaic.version = 11 : i64} {
  func.func @se_kernel(%arg0: i32, %arg1: memref<2x32x256xf32, #tpu.memory_space<vmem>>, %arg2: memref<32x4xf32, #tpu.memory_space<vmem>>, %arg3: memref<1x4xf32, #tpu.memory_space<vmem>>, %arg4: memref<4x32xf32, #tpu.memory_space<vmem>>, %arg5: memref<1x32xf32, #tpu.memory_space<vmem>>, %arg6: memref<2x32x256xf32, #tpu.memory_space<vmem>>) attributes {dimension_semantics = [#tpu.dimension_semantics<parallel>], iteration_bounds = array<i64: 1>, scalar_prefetch = 0 : i64, scratch_operands = 0 : i64, tpu.core_type = #tpu.core_type<tc>, window_params = [{transform_indices = @transform_0, window_bounds = array<i64: 2, 32, 256>}, {pipeline_mode = #tpu.pipeline_mode<synchronous>, transform_indices = @transform_1, window_bounds = array<i64: 32, 4>}, {pipeline_mode = #tpu.pipeline_mode<synchronous>, transform_indices = @transform_2, window_bounds = array<i64: 1, 4>}, {pipeline_mode = #tpu.pipeline_mode<synchronous>, transform_indices = @transform_3, window_bounds = array<i64: 4, 32>}, {pipeline_mode = #tpu.pipeline_mode<synchronous>, transform_indices = @transform_4, window_bounds = array<i64: 1, 32>}, {transform_indices = @transform_5, window_bounds = array<i64: 2, 32, 256>}]} {
    %c0 = arith.constant 0 : index
    %c0_0 = arith.constant 0 : index
    %c0_1 = arith.constant 0 : index
    %0 = vector.load %arg1[%c0, %c0_0, %c0_1] : memref<2x32x256xf32, #tpu.memory_space<vmem>>, vector<2x32x256xf32>
    %cst = arith.constant dense<0.000000e+00> : vector<2x32xf32>
    %1 = vector.multi_reduction <add>, %0, %cst [2] : vector<2x32x256xf32> to vector<2x32xf32>
    %cst_2 = arith.constant 3.906250e-03 : f32
    %2 = vector.broadcast %cst_2 : f32 to vector<2x32xf32>
    %3 = arith.mulf %1, %2 : vector<2x32xf32>
    %c0_3 = arith.constant 0 : index
    %c0_4 = arith.constant 0 : index
    %4 = vector.load %arg2[%c0_3, %c0_4] : memref<32x4xf32, #tpu.memory_space<vmem>>, vector<32x4xf32>
    %cst_5 = arith.constant dense<0.000000e+00> : vector<2x4xf32>
    %5 = tpu.matmul %3, %4, %cst_5 {dimension_numbers = #tpu.dot_dimension_numbers<[1], [0], [0], [1], [0, 0, 1, 1], [], []>} : vector<2x32xf32>, vector<32x4xf32>, vector<2x4xf32> -> vector<2x4xf32>
    %c0_6 = arith.constant 0 : index
    %c0_7 = arith.constant 0 : index
    %6 = vector.load %arg3[%c0_6, %c0_7] : memref<1x4xf32, #tpu.memory_space<vmem>>, vector<1x4xf32>
    %7 = vector.broadcast %6 : vector<1x4xf32> to vector<2x4xf32>
    %8 = arith.addf %5, %7 : vector<2x4xf32>
    %cst_8 = arith.constant 0.000000e+00 : f32
    %9 = vector.broadcast %cst_8 : f32 to vector<2x4xf32>
    %10 = arith.maximumf %8, %9 : vector<2x4xf32>
    %c0_9 = arith.constant 0 : index
    %c0_10 = arith.constant 0 : index
    %11 = vector.load %arg4[%c0_9, %c0_10] : memref<4x32xf32, #tpu.memory_space<vmem>>, vector<4x32xf32>
    %cst_11 = arith.constant dense<0.000000e+00> : vector<2x32xf32>
    %12 = tpu.matmul %10, %11, %cst_11 {dimension_numbers = #tpu.dot_dimension_numbers<[1], [0], [0], [1], [0, 0, 1, 1], [], []>} : vector<2x4xf32>, vector<4x32xf32>, vector<2x32xf32> -> vector<2x32xf32>
    %c0_12 = arith.constant 0 : index
    %c0_13 = arith.constant 0 : index
    %13 = vector.load %arg5[%c0_12, %c0_13] : memref<1x32xf32, #tpu.memory_space<vmem>>, vector<1x32xf32>
    %14 = vector.broadcast %13 : vector<1x32xf32> to vector<2x32xf32>
    %15 = arith.addf %12, %14 : vector<2x32xf32>
    %16 = arith.negf %15 : vector<2x32xf32>
    %17 = math.exp %16 : vector<2x32xf32>
    %cst_14 = arith.constant 1.000000e+00 : f32
    %18 = vector.broadcast %cst_14 : f32 to vector<2x32xf32>
    %19 = arith.addf %18, %17 : vector<2x32xf32>
    %20 = arith.divf %18, %19 : vector<2x32xf32>
    %21 = vector.shape_cast %20 : vector<2x32xf32> to vector<2x32x1xf32>
    %22 = vector.broadcast %21 : vector<2x32x1xf32> to vector<2x32x256xf32>
    %23 = arith.mulf %0, %22 : vector<2x32x256xf32>
    %c0_15 = arith.constant 0 : index
    %c0_16 = arith.constant 0 : index
    %c0_17 = arith.constant 0 : index
    %24 = vector.load %arg6[%c0_15, %c0_16, %c0_17] : memref<2x32x256xf32, #tpu.memory_space<vmem>>, vector<2x32x256xf32>
    tpu.vector_store %arg6[%c0_15, %c0_16, %c0_17], %23 {strides = array<i32>} : memref<2x32x256xf32, #tpu.memory_space<vmem>>, vector<2x32x256xf32>,
    return
  }
  func.func @transform_0(%arg0: i32) -> (i32, i32, i32) {
    %c0_i32 = arith.constant 0 : i32
    %c0_i32_0 = arith.constant 0 : i32
    %c0_i32_1 = arith.constant 0 : i32
    return %arg0, %c0_i32, %c0_i32_0 : i32, i32, i32
  }
  func.func @transform_1(%arg0: i32) -> (i32, i32) {
    %c0_i32 = arith.constant 0 : i32
    %c0_i32_0 = arith.constant 0 : i32
    %c0_i32_1 = arith.constant 0 : i32
    return %c0_i32, %c0_i32_0 : i32, i32
  }
  func.func @transform_2(%arg0: i32) -> (i32, i32) {
    %c0_i32 = arith.constant 0 : i32
    %c0_i32_0 = arith.constant 0 : i32
    %c0_i32_1 = arith.constant 0 : i32
    return %c0_i32, %c0_i32_0 : i32, i32
  }
  func.func @transform_3(%arg0: i32) -> (i32, i32) {
    %c0_i32 = arith.constant 0 : i32
    %c0_i32_0 = arith.constant 0 : i32
    %c0_i32_1 = arith.constant 0 : i32
    return %c0_i32, %c0_i32_0 : i32, i32
  }
  func.func @transform_4(%arg0: i32) -> (i32, i32) {
    %c0_i32 = arith.constant 0 : i32
    %c0_i32_0 = arith.constant 0 : i32
    %c0_i32_1 = arith.constant 0 : i32
    return %c0_i32, %c0_i32_0 : i32, i32
  }
  func.func @transform_5(%arg0: i32) -> (i32, i32, i32) {
    %c0_i32 = arith.constant 0 : i32
    %c0_i32_0 = arith.constant 0 : i32
    %c0_i32_1 = arith.constant 0 : i32
    return %arg0, %c0_i32, %c0_i32_0 : i32, i32, i32
  }
}

</mosaic_0001>

<llo_original>
// kernel: tpu_custom_call.1
$region0: #{tpu_custom_call.1}
  #allocation0 [shape = 'u32[]', space=smem, size = 0x4, offset = 0x4, fixed_abs, tag = 'smem constant byte address 0x4 - core index']
  #allocation1 [shape = 'u32[144,128]{1,0:T(1,128)}', space=vmem, size = 0x12000, scoped, tag = 'internal scratch']
  %s0 = inlined_call_operand.hbm [shape: f32[2,32,256], index: 0, kind: input, shape index: {}]
  %s1 = inlined_call_operand.vmem [shape: f32[32,4], index: 1, kind: input, shape index: {}]
  %s2 = inlined_call_operand.vmem [shape: f32[1,4], index: 2, kind: input, shape index: {}]
  %s3 = inlined_call_operand.vmem [shape: f32[4,32], index: 3, kind: input, shape index: {}]
  %s4 = inlined_call_operand.vmem [shape: f32[1,32], index: 4, kind: input, shape index: {}]
  %s5 = inlined_call_operand.hbm [shape: f32[2,32,256], index: 5, kind: output, shape index: {}]
  %s6 = sld [smem:[#allocation0]]
  $region34: #{tpu_custom_call.1} parent=0
    _
  %s8 = ssub.s32 1, %s6
  %s9 = scalar_select 0, %s8, %s6
  $region1: #{tpu_custom_call.1} parent=0
    #allocation2 [shape = 'u8[65536]{0}', space=vmem, size = 0x10000, scoped, tag = 'input window, operand 0, single buffered']
    #allocation3 [shape = 's32[1]{0}', space=sflag, size = 0x4, scoped, tag = 'scoped memory for tpu_custom_call.1']
    #allocation4 [shape = 's32[1]{0}', space=sflag, size = 0x4, scoped, tag = 'scoped memory for tpu_custom_call.1']
    #allocation5 [shape = 'u8[65536]{0}', space=vmem, size = 0x10000, scoped, tag = 'output window, operand 0, single buffered']
    %10 = vsyncpa [#allocation3], 0
    %11 = vsyncpa [#allocation4], 0
    // Predicated region
    $region2: #{tpu_custom_call.1} parent=1 // pred_check
      _
    $region3: #{tpu_custom_call.1} parent=1 // pred_check_branch
      %13 = sbr.rel (0) target = $region5
    $region4: #{tpu_custom_call.1} parent=1 // pred_region
      %s15 = ssub.s32 2048, 2048
      %16 = vsyncadd [#allocation3], %s15
      %s17 = sshll.u32 [#allocation2], 4
      %s18 = int_to_ptr.vmem [resolvable:$true] %s17
      %23 = dma.hbm_to_vmem [thread:$0]  %s0, 2048, %s18, [#allocation3], 256, 256, 16
    $region5: #{tpu_custom_call.1} parent=1 // pred_fallthru
      _
    // Predicated region
    $region6: #{tpu_custom_call.1} parent=1 // pred_check
      _
    $region7: #{tpu_custom_call.1} parent=1 // pred_check_branch
      %25 = sbr.rel (0) target = $region9
    $region8: #{tpu_custom_call.1} parent=1 // pred_region
      _
    $region9: #{tpu_custom_call.1} parent=1 // pred_fallthru
      _
    // Predicated region
    $region10: #{tpu_custom_call.1} parent=1 // pred_check
      _
    $region11: #{tpu_custom_call.1} parent=1 // pred_check_branch
      %27 = sbr.rel (0) target = $region13
    $region12: #{tpu_custom_call.1} parent=1 // pred_region
      _
    $region13: #{tpu_custom_call.1} parent=1 // pred_fallthru
      _
    // Predicated region
    $region14: #{tpu_custom_call.1} parent=1 // pred_check
      _
    $region15: #{tpu_custom_call.1} parent=1 // pred_check_branch
      %29 = sbr.rel (0) target = $region17
    $region16: #{tpu_custom_call.1} parent=1 // pred_region
      _
    $region17: #{tpu_custom_call.1} parent=1 // pred_fallthru
      _
    // Predicated region
    $region18: #{tpu_custom_call.1} parent=1 // pred_check
      _
    $region19: #{tpu_custom_call.1} parent=1 // pred_check_branch
      %31 = sbr.rel (0) target = $region21
    $region20: #{tpu_custom_call.1} parent=1 // pred_region
      _
    $region21: #{tpu_custom_call.1} parent=1 // pred_fallthru
      _
    // Predicated region
    $region22: #{tpu_custom_call.1} parent=1 // pred_check
      _
    $region23: #{tpu_custom_call.1} parent=1 // pred_check_branch
      %33 = sbr.rel (0) target = $region25
    $region24: #{tpu_custom_call.1} parent=1 // pred_region
      %34 = dma.done [#allocation3], 2048
    $region25: #{tpu_custom_call.1} parent=1 // pred_fallthru
      _
    %v35 = vld [vmem:[#allocation2] sm:$0xff]
    %v36 = vld [vmem:[#allocation2 + $0x8] sm:$0xff]
    %v37 = vld [vmem:[#allocation2 + $0x10] sm:$0xff]
    %v38 = vld [vmem:[#allocation2 + $0x18] sm:$0xff]
    %v39 = vld [vmem:[#allocation2 + $0x20] sm:$0xff]
    %v40 = vld [vmem:[#allocation2 + $0x28] sm:$0xff]
    %v41 = vld [vmem:[#allocation2 + $0x30] sm:$0xff]
    %v42 = vld [vmem:[#allocation2 + $0x38] sm:$0xff]
    %v43 = vld [vmem:[#allocation2 + $0x40] sm:$0xff]
    %v44 = vld [vmem:[#allocation2 + $0x48] sm:$0xff]
    %v45 = vld [vmem:[#allocation2 + $0x50] sm:$0xff]
    %v46 = vld [vmem:[#allocation2 + $0x58] sm:$0xff]
    %v47 = vld [vmem:[#allocation2 + $0x60] sm:$0xff]
    %v48 = vld [vmem:[#allocation2 + $0x68] sm:$0xff]
    %v49 = vld [vmem:[#allocation2 + $0x70] sm:$0xff]
    %v50 = vld [vmem:[#allocation2 + $0x78] sm:$0xff]
    %v51 = vadd.f32 %v35, %v36
    %52 = vadd.xlane.f32.xlu0 %v51
    %v53 = vpop.xlane.xlu0 %52
    %v54 = vadd.f32 %v37, %v38
    %55 = vadd.xlane.f32.xlu0 %v54
    %v56 = vpop.xlane.xlu0 %55
    %v57 = vadd.f32 %v39, %v40
    %58 = vadd.xlane.f32.xlu0 %v57
    %v59 = vpop.xlane.xlu0 %58
    %v60 = vadd.f32 %v41, %v42
    %61 = vadd.xlane.f32.xlu0 %v60
    %v62 = vpop.xlane.xlu0 %61
    %v63 = vadd.f32 %v43, %v44
    %64 = vadd.xlane.f32.xlu0 %v63
    %v65 = vpop.xlane.xlu0 %64
    %v66 = vadd.f32 %v45, %v46
    %67 = vadd.xlane.f32.xlu0 %v66
    %v68 = vpop.xlane.xlu0 %67
    %v69 = vadd.f32 %v47, %v48
    %70 = vadd.xlane.f32.xlu0 %v69
    %v71 = vpop.xlane.xlu0 %70
    %v72 = vadd.f32 %v49, %v50
    %73 = vadd.xlane.f32.xlu0 %v72
    %v74 = vpop.xlane.xlu0 %73
    %v75 = vmul.f32 %v53, 0.00390625
    %v76 = vmul.f32 %v56, 0.00390625
    %v77 = vmul.f32 %v59, 0.00390625
    %v78 = vmul.f32 %v62, 0.00390625
    %v79 = vmul.f32 %v65, 0.00390625
    %v80 = vmul.f32 %v68, 0.00390625
    %v81 = vmul.f32 %v71, 0.00390625
    %v82 = vmul.f32 %v74, 0.00390625
    %v83 = vld [vmem:[%s1] sm:$0xff]
    %v84 = vld [vmem:[%s1 + $0x8] sm:$0xff]
    %v85 = vld [vmem:[%s1 + $0x10] sm:$0xff]
    %v86 = vld [vmem:[%s1 + $0x18] sm:$0xff]
    %v87 = vld [vmem:[%s2] sm:$0x1]
    %v89 = vlaneseq
    %v90 = vshrl.u32 %v89, 7
    %v91 = vsub.s32 0, %v90
    %v92 = vrot.slane %v87, %v91
    %v102 = vlaneseq
    %v103 = vand.u32 %v102, 127
    %v104 = vlaneseq
    %v105 = vshrl.u32 %v104, 7
    %v106 = vsub.s32 %v103, %v105
    %v107 = vrot.slane %v75, %v106
    %v108 = vadd.s32 %v103, 4294967288
    %v109 = vlaneseq
    %v110 = vshrl.u32 %v109, 7
    %v111 = vsub.s32 %v108, %v110
    %v112 = vrot.slane %v76, %v111
    %vm113 = vcmask 130112
    %v114 = vsel %vm113, %v112, %v107
    %v115 = vadd.s32 %v103, 4294967280
    %v116 = vlaneseq
    %v117 = vshrl.u32 %v116, 7
    %v118 = vsub.s32 %v115, %v117
    %v119 = vrot.slane %v77, %v118
    %vm120 = vcmask 195712
    %v121 = vsel %vm120, %v119, %v114
    %v122 = vadd.s32 %v103, 4294967272
    %v123 = vlaneseq
    %v124 = vshrl.u32 %v123, 7
    %v125 = vsub.s32 %v122, %v124
    %v126 = vrot.slane %v78, %v125
    %vm127 = vcmask 261312
    %v128 = vsel %vm127, %v126, %v121
    %v129 = vlaneseq
    %v130 = vshrl.u32 %v129, 7
    %v131 = vsub.s32 %v103, %v130
    %v132 = vrot.slane %v79, %v131
    %v133 = vlaneseq
    %v134 = vshrl.u32 %v133, 7
    %v135 = vsub.s32 %v108, %v134
    %v136 = vrot.slane %v80, %v135
    %v137 = vsel %vm113, %v136, %v132
    %v138 = vlaneseq
    %v139 = vshrl.u32 %v138, 7
    %v140 = vsub.s32 %v115, %v139
    %v141 = vrot.slane %v81, %v140
    %v142 = vsel %vm120, %v141, %v137
    %v143 = vlaneseq
    %v144 = vshrl.u32 %v143, 7
    %v145 = vsub.s32 %v122, %v144
    %v146 = vrot.slane %v82, %v145
    %v147 = vsel %vm127, %v146, %v142
    %vm148 = vcmask 1041409
    %v149 = vsel %vm148, %v147, %v128
    %vm150 = vcmask 261120
    %v151 = vsel %vm150, %v149, 0
    %153 = vmatprep.subr.mxu0 0.0
    %154 = vmatpush1.msra.mxu0 %v83
    %155 = vmatprep.subr.mxu0 0.0
    %156 = vmatpush1.msra.mxu0 %v84
    %157 = vmatprep.subr.mxu0 0.0
    %158 = vmatpush1.msra.mxu0 %v85
    %159 = vmatprep.subr.mxu0 0.0
    %160 = vmatpush1.msra.mxu0 %v86
    %161 = vmatprep.subr.mxu0 0.0
    %162 = vmatpush1.msra.mxu0 0.0
    %163 = vmatprep.subr.mxu0 0.0
    %164 = vmatpush1.msra.mxu0 0.0
    %165 = vmatprep.subr.mxu0 0.0
    %166 = vmatpush1.msra.mxu0 0.0
    %167 = vmatprep.subr.mxu0 0.0
    %168 = vmatpush1.msra.mxu0 0.0
    %169 = vmatprep.subr.mxu0 0.0
    %170 = vmatpush1.msra.mxu0 0.0
    %171 = vmatprep.subr.mxu0 0.0
    %172 = vmatpush1.msra.mxu0 0.0
    %173 = vmatprep.subr.mxu0 0.0
    %174 = vmatpush1.msra.mxu0 0.0
    %175 = vmatprep.subr.mxu0 0.0
    %176 = vmatpush1.msra.mxu0 0.0
    %177 = vmatprep.subr.mxu0 0.0
    %178 = vmatpush1.msra.mxu0 0.0
    %179 = vmatprep.subr.mxu0 0.0
    %180 = vmatpush1.msra.mxu0 0.0
    %181 = vmatprep.subr.mxu0 0.0
    %182 = vmatpush1.msra.mxu0 0.0
    %183 = vmatprep.subr.mxu0 0.0
    %184 = vmatpush1.msra.mxu0 0.0
    %185 = vmatprep.subr.mxu0 0.0
    %186 = vmatpush1.msra.mxu0 0.0
    %187 = vmatprep.subr.mxu0 0.0
    %188 = vmatpush1.msra.mxu0 0.0
    %189 = vmatprep.subr.mxu0 0.0
    %190 = vmatpush1.msra.mxu0 0.0
    %191 = vmatprep.subr.mxu0 0.0
    %192 = vmatpush1.msra.mxu0 0.0
    %193 = vmatprep.subr.mxu0 0.0
    %194 = vmatpush1.msra.mxu0 0.0
    %195 = vmatprep.subr.mxu0 0.0
    %196 = vmatpush1.msra.mxu0 0.0
    %197 = vmatprep.subr.mxu0 0.0
    %198 = vmatpush1.msra.mxu0 0.0
    %199 = vmatprep.subr.mxu0 0.0
    %200 = vmatpush1.msra.mxu0 0.0
    %201 = vmatprep.subr.mxu0 0.0
    %202 = vmatpush1.msra.mxu0 0.0
    %203 = vmatprep.subr.mxu0 0.0
    %204 = vmatpush1.msra.mxu0 0.0
    %205 = vmatprep.subr.mxu0 0.0
    %206 = vmatpush1.msra.mxu0 0.0
    %207 = vmatprep.subr.mxu0 0.0
    %208 = vmatpush1.msra.mxu0 0.0
    %209 = vmatprep.subr.mxu0 0.0
    %210 = vmatpush1.msra.mxu0 0.0
    %211 = vmatprep.subr.mxu0 0.0
    %212 = vmatpush1.msra.mxu0 0.0
    %213 = vmatprep.subr.mxu0 0.0
    %214 = vmatpush1.msra.mxu0 0.0
    %215 = vmatprep.subr.mxu0 0.0
    %216 = vmatpush1.msra.mxu0 0.0
    %217 = vmatprep.mubr.f32.mxu0 0.0
    %218 = vmatmul.mubr.f32.gmra.mrb[0].mxu0 %v151
    %v219 = vpop.f32.mrb[0].mxu0
    %v220 = vadd.f32 %v92, %v219
    %v221 = vpop.f32.mrb[0].mxu0
    %222 = vdwg.mxu0
    %v223 = vmax.f32 %v220, 0.0
    %v224 = vld [vmem:[%s3] sm:$0xf]
    %v225 = vld [vmem:[%s4] sm:$0x1]
    %v227 = vlaneseq
    %v228 = vshrl.u32 %v227, 7
    %v229 = vsub.s32 0, %v228
    %v230 = vrot.slane %v225, %v229
    %vm232 = vcmask 31744
    %v234 = vsel %vm232, %v223, 0
    %vm236 = vcmask 1043456
    %v238 = vsel %vm236, %v224, 0
    %240 = vmatprep.subr.mxu0 0.0
    %241 = vmatpush1.msra.mxu0 %v238
    %242 = vmatprep.subr.mxu0 0.0
    %243 = vmatpush1.msra.mxu0 0.0
    %244 = vmatprep.subr.mxu0 0.0
    %245 = vmatpush1.msra.mxu0 0.0
    %246 = vmatprep.subr.mxu0 0.0
    %247 = vmatpush1.msra.mxu0 0.0
    %248 = vmatprep.subr.mxu0 0.0
    %249 = vmatpush1.msra.mxu0 0.0
    %250 = vmatprep.subr.mxu0 0.0
    %251 = vmatpush1.msra.mxu0 0.0
    %252 = vmatprep.subr.mxu0 0.0
    %253 = vmatpush1.msra.mxu0 0.0
    %254 = vmatprep.subr.mxu0 0.0
    %255 = vmatpush1.msra.mxu0 0.0
    %256 = vmatprep.subr.mxu0 0.0
    %257 = vmatpush1.msra.mxu0 0.0
    %258 = vmatprep.subr.mxu0 0.0
    %259 = vmatpush1.msra.mxu0 0.0
    %260 = vmatprep.subr.mxu0 0.0
    %261 = vmatpush1.msra.mxu0 0.0
    %262 = vmatprep.subr.mxu0 0.0
    %263 = vmatpush1.msra.mxu0 0.0
    %264 = vmatprep.subr.mxu0 0.0
    %265 = vmatpush1.msra.mxu0 0.0
    %266 = vmatprep.subr.mxu0 0.0
    %267 = vmatpush1.msra.mxu0 0.0
    %268 = vmatprep.subr.mxu0 0.0
    %269 = vmatpush1.msra.mxu0 0.0
    %270 = vmatprep.subr.mxu0 0.0
    %271 = vmatpush1.msra.mxu0 0.0
    %272 = vmatprep.subr.mxu0 0.0
    %273 = vmatpush1.msra.mxu0 0.0
    %274 = vmatprep.subr.mxu0 0.0
    %275 = vmatpush1.msra.mxu0 0.0
    %276 = vmatprep.subr.mxu0 0.0
    %277 = vmatpush1.msra.mxu0 0.0
    %278 = vmatprep.subr.mxu0 0.0
    %279 = vmatpush1.msra.mxu0 0.0
    %280 = vmatprep.subr.mxu0 0.0
    %281 = vmatpush1.msra.mxu0 0.0
    %282 = vmatprep.subr.mxu0 0.0
    %283 = vmatpush1.msra.mxu0 0.0
    %284 = vmatprep.subr.mxu0 0.0
    %285 = vmatpush1.msra.mxu0 0.0
    %286 = vmatprep.subr.mxu0 0.0
    %287 = vmatpush1.msra.mxu0 0.0
    %288 = vmatprep.subr.mxu0 0.0
    %289 = vmatpush1.msra.mxu0 0.0
    %290 = vmatprep.subr.mxu0 0.0
    %291 = vmatpush1.msra.mxu0 0.0
    %292 = vmatprep.subr.mxu0 0.0
    %293 = vmatpush1.msra.mxu0 0.0
    %294 = vmatprep.subr.mxu0 0.0
    %295 = vmatpush1.msra.mxu0 0.0
    %296 = vmatprep.subr.mxu0 0.0
    %297 = vmatpush1.msra.mxu0 0.0
    %298 = vmatprep.subr.mxu0 0.0
    %299 = vmatpush1.msra.mxu0 0.0
    %300 = vmatprep.subr.mxu0 0.0
    %301 = vmatpush1.msra.mxu0 0.0
    %302 = vmatprep.subr.mxu0 0.0
    %303 = vmatpush1.msra.mxu0 0.0
    %304 = vmatprep.mubr.f32.mxu0 0.0
    %305 = vmatmul.mubr.f32.gmra.mrb[0].mxu0 %v234
    %v306 = vpop.f32.mrb[0].mxu0
    %v307 = vadd.f32 %v230, %v306
    %v308 = vpop.f32.mrb[0].mxu0
    %309 = vdwg.mxu0
    %v310 = vxor.u32 %v307, 2147483648
    %v311 = vmul.f32 %v310, 1.442695
    %v312 = vpow.pop %v311
    %v313 = vadd.f32 %v312, 1.0
    %v314 = vrcp.pop %v313
    %v315 = vmul.f32 1.0, %v314
    %v316 = vlaneseq
    %v317 = vshrl.u32 %v316, 7
    %v318 = vsub.s32 0, %v317
    %v319 = vrot.slane %v315, %v318
    %321 = vbcast.lane.b32.xlu0 %v319, 256
    %v322 = vpop.permute.xlu0 %321
    %s324 = sor.u32 256, 8
    %325 = vbcast.lane.b32.xlu0 %v319, %s324
    %v326 = vpop.permute.xlu0 %325
    %s328 = sor.u32 256, 16
    %329 = vbcast.lane.b32.xlu0 %v319, %s328
    %v330 = vpop.permute.xlu0 %329
    %s332 = sor.u32 256, 24
    %333 = vbcast.lane.b32.xlu0 %v319, %s332
    %v334 = vpop.permute.xlu0 %333
    %v335 = vlaneseq
    %v336 = vshrl.u32 %v335, 7
    %v337 = vsub.s32 1, %v336
    %v338 = vrot.slane %v315, %v337
    %340 = vbcast.lane.b32.xlu0 %v338, 256
    %v341 = vpop.permute.xlu0 %340
    %s343 = sor.u32 256, 8
    %344 = vbcast.lane.b32.xlu0 %v338, %s343
    %v345 = vpop.permute.xlu0 %344
    %s347 = sor.u32 256, 16
    %348 = vbcast.lane.b32.xlu0 %v338, %s347
    %v349 = vpop.permute.xlu0 %348
    %s351 = sor.u32 256, 24
    %352 = vbcast.lane.b32.xlu0 %v338, %s351
    %v353 = vpop.permute.xlu0 %352
    %v354 = vmul.f32 %v35, %v322
    %v355 = vmul.f32 %v36, %v322
    %v356 = vmul.f32 %v37, %v326
    %v357 = vmul.f32 %v38, %v326
    %v358 = vmul.f32 %v39, %v330
    %v359 = vmul.f32 %v40, %v330
    %v360 = vmul.f32 %v41, %v334
    %v361 = vmul.f32 %v42, %v334
    %v362 = vmul.f32 %v43, %v341
    %v363 = vmul.f32 %v44, %v341
    %v364 = vmul.f32 %v45, %v345
    %v365 = vmul.f32 %v46, %v345
    %v366 = vmul.f32 %v47, %v349
    %v367 = vmul.f32 %v48, %v349
    %v368 = vmul.f32 %v49, %v353
    %v369 = vmul.f32 %v50, %v353
    %370 = vst [vmem:[#allocation5] sm:$0xff] %v354
    %371 = vst [vmem:[#allocation5 + $0x8] sm:$0xff] %v355
    %372 = vst [vmem:[#allocation5 + $0x10] sm:$0xff] %v356
    %373 = vst [vmem:[#allocation5 + $0x18] sm:$0xff] %v357
    %374 = vst [vmem:[#allocation5 + $0x20] sm:$0xff] %v358
    %375 = vst [vmem:[#allocation5 + $0x28] sm:$0xff] %v359
    %376 = vst [vmem:[#allocation5 + $0x30] sm:$0xff] %v360
    %377 = vst [vmem:[#allocation5 + $0x38] sm:$0xff] %v361
    %378 = vst [vmem:[#allocation5 + $0x40] sm:$0xff] %v362
    %379 = vst [vmem:[#allocation5 + $0x48] sm:$0xff] %v363
    %380 = vst [vmem:[#allocation5 + $0x50] sm:$0xff] %v364
    %381 = vst [vmem:[#allocation5 + $0x58] sm:$0xff] %v365
    %382 = vst [vmem:[#allocation5 + $0x60] sm:$0xff] %v366
    %383 = vst [vmem:[#allocation5 + $0x68] sm:$0xff] %v367
    %384 = vst [vmem:[#allocation5 + $0x70] sm:$0xff] %v368
    %385 = vst [vmem:[#allocation5 + $0x78] sm:$0xff] %v369
    // Predicated region
    $region26: #{tpu_custom_call.1} parent=1 // pred_check
      _
    $region27: #{tpu_custom_call.1} parent=1 // pred_check_branch
      %387 = sbr.rel (0) target = $region29
    $region28: #{tpu_custom_call.1} parent=1 // pred_region
      %s389 = ssub.s32 2048, 2048
      %390 = vsyncadd [#allocation4], %s389
      %s391 = sshll.u32 [#allocation5], 4
      %s392 = int_to_ptr.vmem [resolvable:$true] %s391
      %397 = dma.vmem_to_hbm [thread:$0]  %s392, 2048, %s5, [#allocation4], 256, 256, 16
    $region29: #{tpu_custom_call.1} parent=1 // pred_fallthru
      _
    // Predicated region
    $region30: #{tpu_custom_call.1} parent=1 // pred_check
      _
    $region31: #{tpu_custom_call.1} parent=1 // pred_check_branch
      %399 = sbr.rel (0) target = $region33
    $region32: #{tpu_custom_call.1} parent=1 // pred_region
      %400 = dma.done [#allocation4], 2048
    $region33: #{tpu_custom_call.1} parent=1 // pred_fallthru
      _
    %401 = vsyncpa [#allocation3], 1
    %402 = vsyncpa [#allocation4], 1

</llo_original>
